<compile_context>
chip_gen: v7x
topology: tpu7x:2x2x1
jax: 0.10.0
libtpu: 0.0.40
codegen_flags: <defaults>
</compile_context>

<pallas_src>
import math

import numpy as np
import jax
import jax.numpy as jnp
from jax import lax
from jax.experimental import pallas as pl
from jax.experimental.pallas import tpu as pltpu

KSIZE = 5
PAD = 2


def _gaussian_taps_1d(sigma, kernel_size=KSIZE):
    """1D factor of the module's separable Gaussian weight.

    The PyTorch module builds K2d = outer(g, g) / sum(outer(g, g)), which equals
    outer(g/sum(g), g/sum(g)); so the depthwise 5x5 conv is exactly two 1D
    passes with taps g/sum(g).  NOTE: the module's exponent is
    exp(-((x-mean)/(2*std))**2) (effective sigma = sigma*sqrt(2)) -- reproduced
    verbatim ON PURPOSE to keep parity with the PyTorch reference; do not "fix".
    """
    xs = np.arange(kernel_size, dtype=np.float64)
    mean = (kernel_size - 1) / 2.0
    g = (1.0 / (sigma * math.sqrt(2.0 * math.pi))) * np.exp(
        -(((xs - mean) / (2.0 * sigma)) ** 2))
    return g / g.sum()


def gaussian_smoothing(x, sigma):
    """Equivalent to F.conv2d(x, gaussian_weight, groups=C, padding=2), NCHW f32."""
    B, C, H, W = x.shape
    R, L = B * C, H * W
    gv = [float(v) for v in _gaussian_taps_1d(sigma)]   # taps -> immediates

    pow2_w = (W & (W - 1)) == 0
    w_shift = int(round(math.log2(W))) if pow2_w else None

    def kernel(x_ref, o_ref):
        xv = x_ref[...]                                   # (R, L) f32, one load

        # lane index -> (row, col) inside the HxW image; bit ops when W = 2^k
        k = lax.broadcasted_iota(jnp.int32, (R, L), 1)
        if pow2_w:
            col = k & (W - 1)
            row = k >> w_shift
        else:
            col = k % W
            row = k // W

        def separable_pass(v, idx, bound, step):
            # sum_t g[t] * v[.. + (t-PAD)*step], zero-padded outside [0, bound).
            # Circular wrap from roll is always killed by the boundary mask.
            terms = []
            for t in range(KSIZE):
                off = t - PAD
                if off == 0:
                    terms.append(v * gv[t])
                    continue
                shifted = pltpu.roll(v, shift=(-off * step) % L, axis=1)
                mask = (idx >= -off) if off < 0 else (idx < bound - off)
                tap = jnp.where(mask, jnp.float32(gv[t]), jnp.float32(0.0))
                terms.append(shifted * tap)
            # pairwise tree: shorter vmul->vadd critical path than a serial chain
            return (terms[0] + terms[1]) + (terms[2] + terms[3]) + terms[4]

        tmp = separable_pass(xv, col, W, 1)               # along-W (horizontal)
        out = separable_pass(tmp, row, H, W)              # along-H (vertical)
        o_ref[...] = out                                  # single lane-dense store

    xf = x.reshape(R, L).astype(jnp.float32)              # free contiguous reshape
    out = pl.pallas_call(
        kernel,
        out_shape=jax.ShapeDtypeStruct((R, L), jnp.float32),
        in_specs=[pl.BlockSpec((R, L), lambda: (0, 0))],
        out_specs=pl.BlockSpec((R, L), lambda: (0, 0)),
    )(xf)
    return out.reshape(B, C, H, W)


# ---------------------------------------------------------------------------
# Reference (pure JAX, reproduces the PyTorch module's 2D weight construction)
# ---------------------------------------------------------------------------
def _gaussian_weight_2d(sigma, channels, kernel_size=KSIZE, dim=2):
    ks = [kernel_size] * dim
    sig = [sigma] * dim
    kernel = jnp.asarray(1.0, dtype=jnp.float32)
    grids = jnp.meshgrid(*[jnp.arange(s, dtype=jnp.float32) for s in ks],
                         indexing="ij")
    for size, std, mg in zip(ks, sig, grids):
        mean = (size - 1) / 2
        kernel = kernel * (1.0 / (std * math.sqrt(2 * math.pi))
                           * jnp.exp(-(((mg - mean) / (2 * std)) ** 2)))
    kernel = kernel / jnp.sum(kernel)
    return jnp.broadcast_to(kernel[None, None, :, :],
                            (channels, 1) + kernel.shape).astype(jnp.float32)


def _reference(x, sigma):
    B, C, H, W = x.shape
    w = _gaussian_weight_2d(sigma, C)
    return lax.conv_general_dilated(
        x, w, window_strides=(1, 1), padding=[(PAD, PAD), (PAD, PAD)],
        dimension_numbers=("NCHW", "OIHW", "NCHW"), feature_group_count=C,
        precision=lax.Precision.HIGHEST)


if __name__ == "__main__":
    key = jax.random.PRNGKey(0)
    B, C, H, W = 2, 3, 16, 16          # module default channels=3
    sigma = 1.5
    x = jax.random.normal(key, (B, C, H, W), dtype=jnp.float32)

    y = gaussian_smoothing(x, sigma)
    y = jax.block_until_ready(y)

    y_ref = _reference(x, sigma)
    assert y.shape == (B, C, H, W)
    assert bool(jnp.allclose(y, y_ref, atol=1e-5, rtol=1e-4)), (
        float(jnp.max(jnp.abs(y - y_ref))))
    print("KERNEL_OK")
</pallas_src>

<mosaic_0001>
module attributes {stable_mosaic.version = 11 : i64} {
  func.func @kernel(%arg0: memref<6x256xf32, #tpu.memory_space<vmem>>, %arg1: memref<6x256xf32, #tpu.memory_space<vmem>>) attributes {dimension_semantics = [], scalar_prefetch = 0 : i64, scratch_operands = 0 : i64, tpu.core_type = #tpu.core_type<tc>} {
    %c0 = arith.constant 0 : index
    %c0_0 = arith.constant 0 : index
    %0 = vector.load %arg0[%c0, %c0_0] : memref<6x256xf32, #tpu.memory_space<vmem>>, vector<6x256xf32>
    %1 = tpu.iota {dimensions = array<i32: 1>} : vector<6x256xi32>
    %c15_i32 = arith.constant 15 : i32
    %2 = vector.broadcast %c15_i32 : i32 to vector<6x256xi32>
    %3 = arith.andi %1, %2 : vector<6x256xi32>
    %c4_i32 = arith.constant 4 : i32
    %4 = vector.broadcast %c4_i32 : i32 to vector<6x256xi32>
    %5 = arith.shrsi %1, %4 : vector<6x256xi32>
    %c2_i32 = arith.constant 2 : i32
    %6 = tpu.dynamic_rotate %0 by %c2_i32 dim 1 : vector<6x256xf32>, i32 -> vector<6x256xf32>
    %c2_i32_1 = arith.constant 2 : i32
    %7 = vector.broadcast %c2_i32_1 : i32 to vector<6x256xi32>
    %8 = arith.cmpi sge, %3, %7 : vector<6x256xi32>
    %cst = arith.constant 0.157459274 : f32
    %cst_2 = arith.constant 0.000000e+00 : f32
    %9 = vector.broadcast %cst : f32 to vector<6x256xf32>
    %10 = vector.broadcast %cst_2 : f32 to vector<6x256xf32>
    %11 = arith.select %8, %9, %10 : vector<6x256xi1>, vector<6x256xf32>
    %12 = arith.mulf %6, %11 : vector<6x256xf32>
    %c1_i32 = arith.constant 1 : i32
    %13 = tpu.dynamic_rotate %0 by %c1_i32 dim 1 : vector<6x256xf32>, i32 -> vector<6x256xf32>
    %c1_i32_3 = arith.constant 1 : i32
    %14 = vector.broadcast %c1_i32_3 : i32 to vector<6x256xi32>
    %15 = arith.cmpi sge, %3, %14 : vector<6x256xi32>
    %cst_4 = arith.constant 0.219752133 : f32
    %cst_5 = arith.constant 0.000000e+00 : f32
    %16 = vector.broadcast %cst_4 : f32 to vector<6x256xf32>
    %17 = vector.broadcast %cst_5 : f32 to vector<6x256xf32>
    %18 = arith.select %15, %16, %17 : vector<6x256xi1>, vector<6x256xf32>
    %19 = arith.mulf %13, %18 : vector<6x256xf32>
    %cst_6 = arith.constant 0.245577186 : f32
    %20 = vector.broadcast %cst_6 : f32 to vector<6x256xf32>
    %21 = arith.mulf %0, %20 : vector<6x256xf32>
    %c255_i32 = arith.constant 255 : i32
    %22 = tpu.dynamic_rotate %0 by %c255_i32 dim 1 : vector<6x256xf32>, i32 -> vector<6x256xf32>
    %c15_i32_7 = arith.constant 15 : i32
    %23 = vector.broadcast %c15_i32_7 : i32 to vector<6x256xi32>
    %24 = arith.cmpi slt, %3, %23 : vector<6x256xi32>
    %cst_8 = arith.constant 0.219752133 : f32
    %cst_9 = arith.constant 0.000000e+00 : f32
    %25 = vector.broadcast %cst_8 : f32 to vector<6x256xf32>
    %26 = vector.broadcast %cst_9 : f32 to vector<6x256xf32>
    %27 = arith.select %24, %25, %26 : vector<6x256xi1>, vector<6x256xf32>
    %28 = arith.mulf %22, %27 : vector<6x256xf32>
    %c254_i32 = arith.constant 254 : i32
    %29 = tpu.dynamic_rotate %0 by %c254_i32 dim 1 : vector<6x256xf32>, i32 -> vector<6x256xf32>
    %c14_i32 = arith.constant 14 : i32
    %30 = vector.broadcast %c14_i32 : i32 to vector<6x256xi32>
    %31 = arith.cmpi slt, %3, %30 : vector<6x256xi32>
    %cst_10 = arith.constant 0.157459274 : f32
    %cst_11 = arith.constant 0.000000e+00 : f32
    %32 = vector.broadcast %cst_10 : f32 to vector<6x256xf32>
    %33 = vector.broadcast %cst_11 : f32 to vector<6x256xf32>
    %34 = arith.select %31, %32, %33 : vector<6x256xi1>, vector<6x256xf32>
    %35 = arith.mulf %29, %34 : vector<6x256xf32>
    %36 = arith.addf %12, %19 : vector<6x256xf32>
    %37 = arith.addf %21, %28 : vector<6x256xf32>
    %38 = arith.addf %36, %37 : vector<6x256xf32>
    %39 = arith.addf %38, %35 : vector<6x256xf32>
    %c32_i32 = arith.constant 32 : i32
    %40 = tpu.dynamic_rotate %39 by %c32_i32 dim 1 : vector<6x256xf32>, i32 -> vector<6x256xf32>
    %c2_i32_12 = arith.constant 2 : i32
    %41 = vector.broadcast %c2_i32_12 : i32 to vector<6x256xi32>
    %42 = arith.cmpi sge, %5, %41 : vector<6x256xi32>
    %cst_13 = arith.constant 0.157459274 : f32
    %cst_14 = arith.constant 0.000000e+00 : f32
    %43 = vector.broadcast %cst_13 : f32 to vector<6x256xf32>
    %44 = vector.broadcast %cst_14 : f32 to vector<6x256xf32>
    %45 = arith.select %42, %43, %44 : vector<6x256xi1>, vector<6x256xf32>
    %46 = arith.mulf %40, %45 : vector<6x256xf32>
    %c16_i32 = arith.constant 16 : i32
    %47 = tpu.dynamic_rotate %39 by %c16_i32 dim 1 : vector<6x256xf32>, i32 -> vector<6x256xf32>
    %c1_i32_15 = arith.constant 1 : i32
    %48 = vector.broadcast %c1_i32_15 : i32 to vector<6x256xi32>
    %49 = arith.cmpi sge, %5, %48 : vector<6x256xi32>
    %cst_16 = arith.constant 0.219752133 : f32
    %cst_17 = arith.constant 0.000000e+00 : f32
    %50 = vector.broadcast %cst_16 : f32 to vector<6x256xf32>
    %51 = vector.broadcast %cst_17 : f32 to vector<6x256xf32>
    %52 = arith.select %49, %50, %51 : vector<6x256xi1>, vector<6x256xf32>
    %53 = arith.mulf %47, %52 : vector<6x256xf32>
    %cst_18 = arith.constant 0.245577186 : f32
    %54 = vector.broadcast %cst_18 : f32 to vector<6x256xf32>
    %55 = arith.mulf %39, %54 : vector<6x256xf32>
    %c240_i32 = arith.constant 240 : i32
    %56 = tpu.dynamic_rotate %39 by %c240_i32 dim 1 : vector<6x256xf32>, i32 -> vector<6x256xf32>
    %c15_i32_19 = arith.constant 15 : i32
    %57 = vector.broadcast %c15_i32_19 : i32 to vector<6x256xi32>
    %58 = arith.cmpi slt, %5, %57 : vector<6x256xi32>
    %cst_20 = arith.constant 0.219752133 : f32
    %cst_21 = arith.constant 0.000000e+00 : f32
    %59 = vector.broadcast %cst_20 : f32 to vector<6x256xf32>
    %60 = vector.broadcast %cst_21 : f32 to vector<6x256xf32>
    %61 = arith.select %58, %59, %60 : vector<6x256xi1>, vector<6x256xf32>
    %62 = arith.mulf %56, %61 : vector<6x256xf32>
    %c224_i32 = arith.constant 224 : i32
    %63 = tpu.dynamic_rotate %39 by %c224_i32 dim 1 : vector<6x256xf32>, i32 -> vector<6x256xf32>
    %c14_i32_22 = arith.constant 14 : i32
    %64 = vector.broadcast %c14_i32_22 : i32 to vector<6x256xi32>
    %65 = arith.cmpi slt, %5, %64 : vector<6x256xi32>
    %cst_23 = arith.constant 0.157459274 : f32
    %cst_24 = arith.constant 0.000000e+00 : f32
    %66 = vector.broadcast %cst_23 : f32 to vector<6x256xf32>
    %67 = vector.broadcast %cst_24 : f32 to vector<6x256xf32>
    %68 = arith.select %65, %66, %67 : vector<6x256xi1>, vector<6x256xf32>
    %69 = arith.mulf %63, %68 : vector<6x256xf32>
    %70 = arith.addf %46, %53 : vector<6x256xf32>
    %71 = arith.addf %55, %62 : vector<6x256xf32>
    %72 = arith.addf %70, %71 : vector<6x256xf32>
    %73 = arith.addf %72, %69 : vector<6x256xf32>
    %c0_25 = arith.constant 0 : index
    %c0_26 = arith.constant 0 : index
    %74 = vector.load %arg1[%c0_25, %c0_26] : memref<6x256xf32, #tpu.memory_space<vmem>>, vector<6x256xf32>
    tpu.vector_store %arg1[%c0_25, %c0_26], %73 {strides = array<i32>} : memref<6x256xf32, #tpu.memory_space<vmem>>, vector<6x256xf32>,
    return
  }
}

</mosaic_0001>

<llo_original>
// kernel: tpu_custom_call.1
$region0: #{tpu_custom_call.1}
  #allocation0 [shape = 'u32[]', space=smem, size = 0x4, offset = 0x4, fixed_abs, tag = 'smem constant byte address 0x4 - core index']
  #allocation1 [shape = 'u32[144,128]{1,0:T(1,128)}', space=vmem, size = 0x12000, scoped, tag = 'internal scratch']
  %s0 = inlined_call_operand.hbm [shape: f32[6,256], index: 0, kind: input, shape index: {}]
  %s1 = inlined_call_operand.hbm [shape: f32[6,256], index: 1, kind: output, shape index: {}]
  %s2 = sld [smem:[#allocation0]]
  $region18: #{tpu_custom_call.1} parent=0
    _
  %s4 = ssub.s32 1, %s2
  %s5 = scalar_select 0, %s4, %s2
  $region1: #{tpu_custom_call.1} parent=0
    #allocation2 [shape = 'u8[8192]{0}', space=vmem, size = 0x2000, scoped, tag = 'input window, operand 0, single buffered']
    #allocation3 [shape = 's32[1]{0}', space=sflag, size = 0x4, scoped, tag = 'scoped memory for tpu_custom_call.1']
    #allocation4 [shape = 's32[1]{0}', space=sflag, size = 0x4, scoped, tag = 'scoped memory for tpu_custom_call.1']
    #allocation5 [shape = 'u8[8192]{0}', space=vmem, size = 0x2000, scoped, tag = 'output window, operand 0, single buffered']
    %6 = vsyncpa [#allocation3], 0
    %7 = vsyncpa [#allocation4], 0
    // Predicated region
    $region2: #{tpu_custom_call.1} parent=1 // pred_check
      _
    $region3: #{tpu_custom_call.1} parent=1 // pred_check_branch
      %9 = sbr.rel (0) target = $region5
    $region4: #{tpu_custom_call.1} parent=1 // pred_region
      %s11 = ssub.s32 256, 256
      %12 = vsyncadd [#allocation3], %s11
      %s14 = sshll.u32 [#allocation2], 4
      %s15 = int_to_ptr.vmem [resolvable:$true] %s14
      %17 = dma.hbm_to_vmem [thread:$0]  %s0, 256, %s15, [#allocation3]
    $region5: #{tpu_custom_call.1} parent=1 // pred_fallthru
      _
    // Predicated region
    $region6: #{tpu_custom_call.1} parent=1 // pred_check
      _
    $region7: #{tpu_custom_call.1} parent=1 // pred_check_branch
      %19 = sbr.rel (0) target = $region9
    $region8: #{tpu_custom_call.1} parent=1 // pred_region
      %20 = dma.done [#allocation3], 256
    $region9: #{tpu_custom_call.1} parent=1 // pred_fallthru
      _
    %v21 = vld [vmem:[#allocation2] sm:$0x3f]
    %v22 = vld [vmem:[#allocation2 + $0x8] sm:$0x3f]
    %v23 = vlaneseq
    %v24 = vand.u32 %v23, 127
    %v25 = vadd.s32 %v24, 128
    %v26 = vand.u32 %v24, 15
    %v27 = vand.u32 %v25, 15
    %v28 = vshra.s32 %v24, 4
    %v29 = vshra.s32 %v25, 4
    %30 = vrot.lane.b32.xlu0 %v21, 2
    %v31 = vpop.permute.xlu0 %30
    %32 = vrot.lane.b32.xlu0 %v22, 2
    %v33 = vpop.permute.xlu0 %32
    %vm34 = vcmp.lt.s32.totalorder %v24, 2
    %v35 = vsel %vm34, %v31, %v33
    %v36 = vsel %vm34, %v33, %v31
    %vm37 = vcmp.ge.s32.totalorder %v26, 2
    %vm38 = vcmp.ge.s32.totalorder %v27, 2
    %v39 = vsel %vm37, 0.15745927, 0.0
    %v40 = vsel %vm38, 0.15745927, 0.0
    %v41 = vmul.f32 %v36, %v39
    %v42 = vmul.f32 %v35, %v40
    %43 = vrot.lane.b32.xlu0 %v21, 1
    %v44 = vpop.permute.xlu0 %43
    %45 = vrot.lane.b32.xlu0 %v22, 1
    %v46 = vpop.permute.xlu0 %45
    %vm47 = vcmp.lt.s32.totalorder %v24, 1
    %v48 = vsel %vm47, %v44, %v46
    %v49 = vsel %vm47, %v46, %v44
    %vm50 = vcmp.ge.s32.totalorder %v26, 1
    %vm51 = vcmp.ge.s32.totalorder %v27, 1
    %v52 = vsel %vm50, 0.21975213, 0.0
    %v53 = vsel %vm51, 0.21975213, 0.0
    %v54 = vmul.f32 %v49, %v52
    %v55 = vmul.f32 %v48, %v53
    %v56 = vmul.f32 %v21, 0.24557719
    %v57 = vmul.f32 %v22, 0.24557719
    %58 = vrot.lane.b32.xlu0 %v21, 127
    %v59 = vpop.permute.xlu0 %58
    %60 = vrot.lane.b32.xlu0 %v22, 127
    %v61 = vpop.permute.xlu0 %60
    %vm62 = vcmp.lt.s32.totalorder %v24, 127
    %v63 = vsel %vm62, %v59, %v61
    %v64 = vsel %vm62, %v61, %v59
    %vm65 = vcmp.lt.s32.totalorder %v26, 15
    %vm66 = vcmp.lt.s32.totalorder %v27, 15
    %v67 = vsel %vm65, 0.21975213, 0.0
    %v68 = vsel %vm66, 0.21975213, 0.0
    %v69 = vmul.f32 %v63, %v67
    %v70 = vmul.f32 %v64, %v68
    %71 = vrot.lane.b32.xlu0 %v21, 126
    %v72 = vpop.permute.xlu0 %71
    %73 = vrot.lane.b32.xlu0 %v22, 126
    %v74 = vpop.permute.xlu0 %73
    %vm75 = vcmp.lt.s32.totalorder %v24, 126
    %v76 = vsel %vm75, %v72, %v74
    %v77 = vsel %vm75, %v74, %v72
    %vm78 = vcmp.lt.s32.totalorder %v26, 14
    %vm79 = vcmp.lt.s32.totalorder %v27, 14
    %v80 = vsel %vm78, 0.15745927, 0.0
    %v81 = vsel %vm79, 0.15745927, 0.0
    %v82 = vmul.f32 %v76, %v80
    %v83 = vmul.f32 %v77, %v81
    %v84 = vadd.f32 %v41, %v54
    %v85 = vadd.f32 %v42, %v55
    %v86 = vadd.f32 %v56, %v69
    %v87 = vadd.f32 %v57, %v70
    %v88 = vadd.f32 %v84, %v86
    %v89 = vadd.f32 %v85, %v87
    %v90 = vadd.f32 %v88, %v82
    %v91 = vadd.f32 %v89, %v83
    %92 = vrot.lane.b32.xlu0 %v90, 32
    %v93 = vpop.permute.xlu0 %92
    %94 = vrot.lane.b32.xlu0 %v91, 32
    %v95 = vpop.permute.xlu0 %94
    %vm96 = vcmp.lt.s32.totalorder %v24, 32
    %v97 = vsel %vm96, %v93, %v95
    %v98 = vsel %vm96, %v95, %v93
    %vm99 = vcmp.ge.s32.totalorder %v28, 2
    %vm100 = vcmp.ge.s32.totalorder %v29, 2
    %v101 = vsel %vm99, 0.15745927, 0.0
    %v102 = vsel %vm100, 0.15745927, 0.0
    %v103 = vmul.f32 %v98, %v101
    %v104 = vmul.f32 %v97, %v102
    %105 = vrot.lane.b32.xlu0 %v90, 16
    %v106 = vpop.permute.xlu0 %105
    %107 = vrot.lane.b32.xlu0 %v91, 16
    %v108 = vpop.permute.xlu0 %107
    %vm109 = vcmp.lt.s32.totalorder %v24, 16
    %v110 = vsel %vm109, %v106, %v108
    %v111 = vsel %vm109, %v108, %v106
    %vm112 = vcmp.ge.s32.totalorder %v28, 1
    %vm113 = vcmp.ge.s32.totalorder %v29, 1
    %v114 = vsel %vm112, 0.21975213, 0.0
    %v115 = vsel %vm113, 0.21975213, 0.0
    %v116 = vmul.f32 %v111, %v114
    %v117 = vmul.f32 %v110, %v115
    %v118 = vmul.f32 %v90, 0.24557719
    %v119 = vmul.f32 %v91, 0.24557719
    %120 = vrot.lane.b32.xlu0 %v90, 112
    %v121 = vpop.permute.xlu0 %120
    %122 = vrot.lane.b32.xlu0 %v91, 112
    %v123 = vpop.permute.xlu0 %122
    %vm124 = vcmp.lt.s32.totalorder %v24, 112
    %v125 = vsel %vm124, %v121, %v123
    %v126 = vsel %vm124, %v123, %v121
    %vm127 = vcmp.lt.s32.totalorder %v28, 15
    %vm128 = vcmp.lt.s32.totalorder %v29, 15
    %v129 = vsel %vm127, 0.21975213, 0.0
    %v130 = vsel %vm128, 0.21975213, 0.0
    %v131 = vmul.f32 %v125, %v129
    %v132 = vmul.f32 %v126, %v130
    %133 = vrot.lane.b32.xlu0 %v90, 96
    %v134 = vpop.permute.xlu0 %133
    %135 = vrot.lane.b32.xlu0 %v91, 96
    %v136 = vpop.permute.xlu0 %135
    %vm137 = vcmp.lt.s32.totalorder %v24, 96
    %v138 = vsel %vm137, %v134, %v136
    %v139 = vsel %vm137, %v136, %v134
    %vm140 = vcmp.lt.s32.totalorder %v28, 14
    %vm141 = vcmp.lt.s32.totalorder %v29, 14
    %v142 = vsel %vm140, 0.15745927, 0.0
    %v143 = vsel %vm141, 0.15745927, 0.0
    %v144 = vmul.f32 %v138, %v142
    %v145 = vmul.f32 %v139, %v143
    %v146 = vadd.f32 %v103, %v116
    %v147 = vadd.f32 %v104, %v117
    %v148 = vadd.f32 %v118, %v131
    %v149 = vadd.f32 %v119, %v132
    %v150 = vadd.f32 %v146, %v148
    %v151 = vadd.f32 %v147, %v149
    %v152 = vadd.f32 %v150, %v144
    %v153 = vadd.f32 %v151, %v145
    %154 = vst [vmem:[#allocation5] sm:$0x3f] %v152
    %155 = vst [vmem:[#allocation5 + $0x8] sm:$0x3f] %v153
    // Predicated region
    $region10: #{tpu_custom_call.1} parent=1 // pred_check
      _
    $region11: #{tpu_custom_call.1} parent=1 // pred_check_branch
      %157 = sbr.rel (0) target = $region13
    $region12: #{tpu_custom_call.1} parent=1 // pred_region
      %s159 = ssub.s32 256, 256
      %160 = vsyncadd [#allocation4], %s159
      %s162 = sshll.u32 [#allocation5], 4
      %s163 = int_to_ptr.vmem [resolvable:$true] %s162
      %165 = dma.vmem_to_hbm [thread:$0]  %s163, 256, %s1, [#allocation4]
    $region13: #{tpu_custom_call.1} parent=1 // pred_fallthru
      _
    // Predicated region
    $region14: #{tpu_custom_call.1} parent=1 // pred_check
      _
    $region15: #{tpu_custom_call.1} parent=1 // pred_check_branch
      %167 = sbr.rel (0) target = $region17
    $region16: #{tpu_custom_call.1} parent=1 // pred_region
      %168 = dma.done [#allocation4], 256
    $region17: #{tpu_custom_call.1} parent=1 // pred_fallthru
      _
    %169 = vsyncpa [#allocation3], 1
    %170 = vsyncpa [#allocation4], 1

</llo_original>
